<compile_context>
chip_gen: v6e
topology: v6e:2x2x1
jax: 0.10.0
libtpu: 0.0.40
codegen_flags: <defaults>
</compile_context>

<pallas_src>
import functools
import math

import jax
import jax.numpy as jnp
from jax.experimental import pallas as pl
from jax.experimental.pallas import tpu as pltpu

_MIB = 1024 * 1024


def _round_up(x, m):
    return (x + m - 1) // m * m


def _cdiv(a, b):
    return -(-a // b)


@functools.lru_cache(maxsize=1)
def _vmem_capacity_and_cores():
    """Returns (per-core VMEM bytes, two_tensorcores?) — cached, outside jit."""
    cap = 128 * _MIB                       # v5e / v6e class default
    try:
        info = pltpu.get_tpu_info()
        c = getattr(info, "vmem_capacity_bytes", None)
        if c:
            cap = int(c)
    except Exception:
        pass
    # v7x heuristic: 64 MiB VMEM per TensorCore and 2 TCs per chip -> keep the
    # "parallel" token-tile count even so both cores stay busy.
    two_cores = cap <= 80 * _MIB
    return cap, two_cores


# ------------------------------ kernels ------------------------------------


def _ffn_kernel_resident(x_ref, w1_ref, b1_ref, w2_ref, b2_ref, o_ref):
    # x_ref : (tm, H)   w1_ref: (H, F)  b1_ref: (1, F)
    # w2_ref: (F, H)    b2_ref: (1, H)  o_ref : (tm, H)
    h = jnp.dot(x_ref[...], w1_ref[...], preferred_element_type=jnp.float32)
    h = jnp.maximum(h + b1_ref[...].astype(jnp.float32), 0.0)       # ReLU
    out = jnp.dot(h.astype(w2_ref.dtype), w2_ref[...],
                  preferred_element_type=jnp.float32)
    o_ref[...] = (out + b2_ref[...].astype(jnp.float32)).astype(o_ref.dtype)


def _ffn_kernel_streamed(x_ref, w1_ref, b1_ref, w2_ref, b2_ref, o_ref, acc_ref):
    # grid = (M tiles, ffn chunks); ffn-chunk axis is last and "arbitrary".
    # x_ref : (tm, H)   w1_ref: (H, tk)  b1_ref: (1, tk)
    # w2_ref: (tk, H)   b2_ref: (1, H)   o_ref: (tm, H)   acc_ref: (tm, H) f32
    k = pl.program_id(1)

    @pl.when(k == 0)
    def _():
        acc_ref[...] = jnp.zeros_like(acc_ref)

    h = jnp.dot(x_ref[...], w1_ref[...], preferred_element_type=jnp.float32)
    h = jnp.maximum(h + b1_ref[...].astype(jnp.float32), 0.0)       # ReLU
    acc_ref[...] += jnp.dot(h.astype(w2_ref.dtype), w2_ref[...],
                            preferred_element_type=jnp.float32)

    @pl.when(k == pl.num_programs(1) - 1)
    def _():
        o_ref[...] = (acc_ref[...]
                      + b2_ref[...].astype(jnp.float32)).astype(o_ref.dtype)


# --------------------------- footprint models -------------------------------


def _resident_bytes(tm, H, F, w_bytes, x_bytes):
    weights = (H * F + F * H + F + H) * w_bytes        # single-buffered
    io = 2 * 2 * tm * H * x_bytes                      # double-buffered x / out
    temps = tm * F * 4 + tm * F * w_bytes + tm * H * 4  # f32 h, h cast, f32 out
    return weights + io + temps


def _streamed_bytes(tm, tk, H, F, w_bytes, x_bytes):
    weights = 2 * (H * tk + tk * H + tk) * w_bytes + H * w_bytes  # dbl-buf chunks
    io = 2 * 2 * tm * H * x_bytes
    temps = tm * H * 4 + tm * tk * 4 + tm * tk * w_bytes  # acc, f32 h, h cast
    return weights + io + temps


def _choose_tm(M, tm_target, two_cores):
    """Sublane-aligned token tile + tile count (even on 2-TC chips)."""
    tm_eff = _round_up(min(max(tm_target, 16), _round_up(M, 16)), 16)
    n = _cdiv(M, tm_eff)
    if two_cores and M > 16 and n % 2 == 1:
        n += 1
        tm_eff = _round_up(_cdiv(M, n), 16)
        n = _cdiv(M, tm_eff)
        if n % 2 == 1:
            n += 1
    return tm_eff, n


# ------------------------------ wrapper -------------------------------------


@functools.partial(jax.jit,
                   static_argnames=("tm_eff", "tk_eff", "n_tiles",
                                    "use_resident", "vmem_limit_bytes"))
def _ffn_impl(x, w1, b1, w2, b2, *, tm_eff, tk_eff, n_tiles, use_resident,
              vmem_limit_bytes):
    lead = x.shape[:-1]
    hidden = x.shape[-1]
    M = math.prod(lead)
    Mp = n_tiles * tm_eff

    Hw, Fw = w1.shape
    H, F = _round_up(Hw, 128), _round_up(Fw, 128)
    # Prefer pad_params() once at init; this trace-time fallback keeps raw
    # nn.Linear-shaped weights working (at the cost of a per-call pad).
    if (H, F) != (Hw, Fw):
        w1 = jnp.pad(w1, ((0, H - Hw), (0, F - Fw)))
        b1 = jnp.pad(b1, ((0, 0), (0, F - Fw)))
        w2 = jnp.pad(w2, ((0, F - Fw), (0, H - Hw)))
        b2 = jnp.pad(b2, ((0, 0), (0, H - Hw)))

    x2d = x.reshape(M, hidden)
    if (Mp, H) != (M, hidden):
        x2d = jnp.pad(x2d, ((0, Mp - M), (0, H - hidden)))

    w_bytes = jnp.dtype(w1.dtype).itemsize
    x_bytes = jnp.dtype(x.dtype).itemsize
    flops = 2 * 2 * Mp * H * F
    if use_resident:
        # weights read once + x read + out write
        bytes_accessed = ((H * F + F * H + F + H) * w_bytes
                          + 2 * Mp * H * x_bytes)
    else:
        # weights re-read once per token tile + x read + out write
        bytes_accessed = (n_tiles * (H * F + F * H + F) * w_bytes + H * w_bytes
                          + 2 * Mp * H * x_bytes)
    cost = pl.CostEstimate(flops=flops, transcendentals=0,
                           bytes_accessed=bytes_accessed)

    if use_resident:
        # ---- weight-resident path: only token tiles are pipelined ----
        out2d = pl.pallas_call(
            _ffn_kernel_resident,
            out_shape=jax.ShapeDtypeStruct((Mp, H), x.dtype),
            grid_spec=pltpu.PrefetchScalarGridSpec(
                num_scalar_prefetch=0,
                grid=(n_tiles,),
                in_specs=[
                    pl.BlockSpec((tm_eff, H), lambda i: (i, 0)),
                    pl.BlockSpec((H, F), lambda i: (0, 0),
                                 pipeline_mode=pl.Buffered(1)),
                    pl.BlockSpec((1, F), lambda i: (0, 0),
                                 pipeline_mode=pl.Buffered(1)),
                    pl.BlockSpec((F, H), lambda i: (0, 0),
                                 pipeline_mode=pl.Buffered(1)),
                    pl.BlockSpec((1, H), lambda i: (0, 0),
                                 pipeline_mode=pl.Buffered(1)),
                ],
                out_specs=pl.BlockSpec((tm_eff, H), lambda i: (i, 0)),
            ),
            compiler_params=pltpu.CompilerParams(
                dimension_semantics=("parallel",),
                vmem_limit_bytes=vmem_limit_bytes),
            cost_estimate=cost,
        )(x2d, w1, b1, w2, b2)
    else:
        # ---- ffn-streamed path: stream W1/W2 chunks, accumulate in f32 ----
        out2d = pl.pallas_call(
            _ffn_kernel_streamed,
            out_shape=jax.ShapeDtypeStruct((Mp, H), x.dtype),
            grid_spec=pltpu.PrefetchScalarGridSpec(
                num_scalar_prefetch=0,
                grid=(n_tiles, F // tk_eff),
                in_specs=[
                    pl.BlockSpec((tm_eff, H), lambda i, k: (i, 0)),
                    pl.BlockSpec((H, tk_eff), lambda i, k: (0, k)),
                    pl.BlockSpec((1, tk_eff), lambda i, k: (0, k)),
                    pl.BlockSpec((tk_eff, H), lambda i, k: (k, 0)),
                    pl.BlockSpec((1, H), lambda i, k: (0, 0),
                                 pipeline_mode=pl.Buffered(1)),
                ],
                out_specs=pl.BlockSpec((tm_eff, H), lambda i, k: (i, 0)),
                scratch_shapes=[pltpu.VMEM((tm_eff, H), jnp.float32)],
            ),
            compiler_params=pltpu.CompilerParams(
                dimension_semantics=("parallel", "arbitrary"),
                vmem_limit_bytes=vmem_limit_bytes),
            cost_estimate=cost,
        )(x2d, w1, b1, w2, b2)

    return out2d[:M, :hidden].reshape(*lead, hidden)


def ffn_forward(x, w1, b1, w2, b2, *, tm=None, tk=None, force_streamed=False):
    """x: (..., hidden) -> (..., hidden).

    All tiling / path decisions are made here with Python ints (generation-
    aware via the cached VMEM capacity) and passed as static args to the
    jitted implementation.
    """
    hidden = x.shape[-1]
    M = math.prod(x.shape[:-1])
    H = _round_up(w1.shape[0], 128)
    F = _round_up(w1.shape[1], 128)
    w_bytes = jnp.dtype(w1.dtype).itemsize
    x_bytes = jnp.dtype(x.dtype).itemsize

    cap, two_cores = _vmem_capacity_and_cores()
    vmem_limit_bytes = int(cap * 0.75)   # headroom for Mosaic scratch / sems
    budget = int(cap * 0.55)             # resident/streamed + tile threshold

    use_resident = False
    tm_eff, n_tiles, tk_eff = 0, 0, 0

    if not force_streamed:
        t = max(16, tm if tm is not None else 512)
        while True:
            tm_eff, n_tiles = _choose_tm(M, t, two_cores)
            if _resident_bytes(tm_eff, H, F, w_bytes, x_bytes) <= budget:
                use_resident = True
                break
            if t <= 128:
                break
            t //= 2

    if not use_resident:
        if tk is not None:
            tkc = min(_round_up(tk, 128), F)
            while F % tkc != 0:          # F multiple of 128 -> terminates
                tkc -= 128
            tk_cands = [tkc]
        else:
            # prefer large multiples of 256 for the 256x256 MXUs (v6e/v7x)
            tk_cands = [t for t in (1024, 768, 512, 384, 256, 128)
                        if t <= F and F % t == 0]
        tm_targets = [tm] if tm is not None else [512, 384, 256, 128]
        chosen = None
        for t in tm_targets:
            tm_c, n_c = _choose_tm(M, t, two_cores)
            for tkc in tk_cands:
                if _streamed_bytes(tm_c, tkc, H, F, w_bytes, x_bytes) <= budget:
                    chosen = (tm_c, n_c, tkc)
                    break
            if chosen is not None:
                break
        if chosen is None:
            tm_c, n_c = _choose_tm(M, 128, two_cores)
            chosen = (tm_c, n_c, 128)
        tm_eff, n_tiles, tk_eff = chosen

    return _ffn_impl(x, w1, b1, w2, b2,
                     tm_eff=tm_eff, tk_eff=tk_eff, n_tiles=n_tiles,
                     use_resident=use_resident,
                     vmem_limit_bytes=vmem_limit_bytes)


# ------------------------------ params --------------------------------------


def pad_params(w1, b1, w2, b2):
    """Pad feature dims to multiples of 128 ONCE (hoisted out of per-call jit).

    Zero padding keeps the math exact: padded ffn columns produce ReLU(0)=0
    and padded hidden columns are zero and sliced off by the wrapper.
    """
    hidden, ffn = w1.shape
    H, F = _round_up(hidden, 128), _round_up(ffn, 128)
    if (H, F) == (hidden, ffn):
        return w1, b1, w2, b2
    w1 = jnp.pad(w1, ((0, H - hidden), (0, F - ffn)))
    b1 = jnp.pad(b1, ((0, 0), (0, F - ffn)))
    w2 = jnp.pad(w2, ((0, F - ffn), (0, H - hidden)))
    b2 = jnp.pad(b2, ((0, 0), (0, H - hidden)))
    return w1, b1, w2, b2


def init_params(key, hidden, ffn, dtype=jnp.float32):
    """Deterministic synthetic init matching nn.Linear shapes.

    PyTorch nn.Linear(hidden, ffn) has weight (ffn, hidden); we store its
    transpose (hidden, ffn) so the kernel does x @ W directly.
    """
    k1, k2, k3, k4 = jax.random.split(key, 4)
    bound1 = 1.0 / jnp.sqrt(hidden)
    bound2 = 1.0 / jnp.sqrt(ffn)
    w1 = jax.random.uniform(k1, (hidden, ffn), dtype, -bound1, bound1)
    b1 = jax.random.uniform(k2, (1, ffn), dtype, -bound1, bound1)
    w2 = jax.random.uniform(k3, (ffn, hidden), dtype, -bound2, bound2)
    b2 = jax.random.uniform(k4, (1, hidden), dtype, -bound2, bound2)
    return w1, b1, w2, b2


if __name__ == "__main__":
    # small toy shapes consistent with the module
    batch, seq, hidden, ffn = 2, 8, 32, 64

    key = jax.random.PRNGKey(0)
    kx, kp = jax.random.split(key)
    x = jax.random.normal(kx, (batch, seq, hidden), jnp.float32)
    w1, b1, w2, b2 = init_params(kp, hidden, ffn)
    # pad the weights once, outside the per-call jit
    w1p, b1p, w2p, b2p = pad_params(w1, b1, w2, b2)

    ref = jnp.maximum(x @ w1 + b1[0], 0.0) @ w2 + b2[0]

    # default (weight-resident) path
    out = jax.block_until_ready(ffn_forward(x, w1p, b1p, w2p, b2p))
    assert out.shape == (batch, seq, hidden)
    assert jnp.allclose(out, ref, atol=1e-5, rtol=1e-5)

    # force the ffn-streamed path
    out_s = jax.block_until_ready(
        ffn_forward(x, w1p, b1p, w2p, b2p, force_streamed=True))
    assert jnp.allclose(out_s, ref, atol=1e-5, rtol=1e-5)

    # larger lane-dense shapes: multiple token tiles AND multiple ffn chunks
    b2_, s2_, h2_, f2_ = 2, 16, 128, 384
    kx2, kp2 = jax.random.split(jax.random.PRNGKey(1))
    x2 = jax.random.normal(kx2, (b2_, s2_, h2_), jnp.float32)
    W1, B1, W2, B2 = init_params(kp2, h2_, f2_)
    ref2 = jnp.maximum(x2 @ W1 + B1[0], 0.0) @ W2 + B2[0]
    out2 = jax.block_until_ready(
        ffn_forward(x2, W1, B1, W2, B2, tm=16, tk=128, force_streamed=True))
    assert jnp.allclose(out2, ref2, atol=1e-4, rtol=1e-4)

    print("KERNEL_OK")
</pallas_src>

<mosaic_0001>
module attributes {stable_mosaic.version = 11 : i64} {
  func.func @_ffn_kernel_resident(%arg0: i32, %arg1: memref<16x128xf32, #tpu.memory_space<vmem>>, %arg2: memref<128x128xf32, #tpu.memory_space<vmem>>, %arg3: memref<1x128xf32, #tpu.memory_space<vmem>>, %arg4: memref<128x128xf32, #tpu.memory_space<vmem>>, %arg5: memref<1x128xf32, #tpu.memory_space<vmem>>, %arg6: memref<16x128xf32, #tpu.memory_space<vmem>>) attributes {dimension_semantics = [#tpu.dimension_semantics<parallel>], iteration_bounds = array<i64: 1>, scalar_prefetch = 0 : i64, scratch_operands = 0 : i64, tpu.core_type = #tpu.core_type<tc>, window_params = [{transform_indices = @transform_0, window_bounds = array<i64: 16, 128>}, {pipeline_mode = #tpu.pipeline_mode<synchronous>, transform_indices = @transform_1, window_bounds = array<i64: 128, 128>}, {pipeline_mode = #tpu.pipeline_mode<synchronous>, transform_indices = @transform_2, window_bounds = array<i64: 1, 128>}, {pipeline_mode = #tpu.pipeline_mode<synchronous>, transform_indices = @transform_3, window_bounds = array<i64: 128, 128>}, {pipeline_mode = #tpu.pipeline_mode<synchronous>, transform_indices = @transform_4, window_bounds = array<i64: 1, 128>}, {transform_indices = @transform_5, window_bounds = array<i64: 16, 128>}]} {
    %c0 = arith.constant 0 : index
    %c0_0 = arith.constant 0 : index
    %0 = vector.load %arg1[%c0, %c0_0] : memref<16x128xf32, #tpu.memory_space<vmem>>, vector<16x128xf32>
    %c0_1 = arith.constant 0 : index
    %c0_2 = arith.constant 0 : index
    %1 = vector.load %arg2[%c0_1, %c0_2] : memref<128x128xf32, #tpu.memory_space<vmem>>, vector<128x128xf32>
    %cst = arith.constant dense<0.000000e+00> : vector<16x128xf32>
    %2 = tpu.matmul %0, %1, %cst {dimension_numbers = #tpu.dot_dimension_numbers<[1], [0], [0], [1], [0, 0, 1, 1], [], []>} : vector<16x128xf32>, vector<128x128xf32>, vector<16x128xf32> -> vector<16x128xf32>
    %c0_3 = arith.constant 0 : index
    %c0_4 = arith.constant 0 : index
    %3 = vector.load %arg3[%c0_3, %c0_4] : memref<1x128xf32, #tpu.memory_space<vmem>>, vector<1x128xf32>
    %4 = vector.broadcast %3 : vector<1x128xf32> to vector<16x128xf32>
    %5 = arith.addf %2, %4 : vector<16x128xf32>
    %cst_5 = arith.constant 0.000000e+00 : f32
    %6 = vector.broadcast %cst_5 : f32 to vector<16x128xf32>
    %7 = arith.maximumf %5, %6 : vector<16x128xf32>
    %c0_6 = arith.constant 0 : index
    %c0_7 = arith.constant 0 : index
    %8 = vector.load %arg4[%c0_6, %c0_7] : memref<128x128xf32, #tpu.memory_space<vmem>>, vector<128x128xf32>
    %cst_8 = arith.constant dense<0.000000e+00> : vector<16x128xf32>
    %9 = tpu.matmul %7, %8, %cst_8 {dimension_numbers = #tpu.dot_dimension_numbers<[1], [0], [0], [1], [0, 0, 1, 1], [], []>} : vector<16x128xf32>, vector<128x128xf32>, vector<16x128xf32> -> vector<16x128xf32>
    %c0_9 = arith.constant 0 : index
    %c0_10 = arith.constant 0 : index
    %10 = vector.load %arg5[%c0_9, %c0_10] : memref<1x128xf32, #tpu.memory_space<vmem>>, vector<1x128xf32>
    %11 = vector.broadcast %10 : vector<1x128xf32> to vector<16x128xf32>
    %12 = arith.addf %9, %11 : vector<16x128xf32>
    %c0_11 = arith.constant 0 : index
    %c0_12 = arith.constant 0 : index
    %13 = vector.load %arg6[%c0_11, %c0_12] : memref<16x128xf32, #tpu.memory_space<vmem>>, vector<16x128xf32>
    tpu.vector_store %arg6[%c0_11, %c0_12], %12 {strides = array<i32>} : memref<16x128xf32, #tpu.memory_space<vmem>>, vector<16x128xf32>,
    return
  }
  func.func @transform_0(%arg0: i32) -> (i32, i32) {
    %c0_i32 = arith.constant 0 : i32
    %c0_i32_0 = arith.constant 0 : i32
    return %arg0, %c0_i32 : i32, i32
  }
  func.func @transform_1(%arg0: i32) -> (i32, i32) {
    %c0_i32 = arith.constant 0 : i32
    %c0_i32_0 = arith.constant 0 : i32
    %c0_i32_1 = arith.constant 0 : i32
    return %c0_i32, %c0_i32_0 : i32, i32
  }
  func.func @transform_2(%arg0: i32) -> (i32, i32) {
    %c0_i32 = arith.constant 0 : i32
    %c0_i32_0 = arith.constant 0 : i32
    %c0_i32_1 = arith.constant 0 : i32
    return %c0_i32, %c0_i32_0 : i32, i32
  }
  func.func @transform_3(%arg0: i32) -> (i32, i32) {
    %c0_i32 = arith.constant 0 : i32
    %c0_i32_0 = arith.constant 0 : i32
    %c0_i32_1 = arith.constant 0 : i32
    return %c0_i32, %c0_i32_0 : i32, i32
  }
  func.func @transform_4(%arg0: i32) -> (i32, i32) {
    %c0_i32 = arith.constant 0 : i32
    %c0_i32_0 = arith.constant 0 : i32
    %c0_i32_1 = arith.constant 0 : i32
    return %c0_i32, %c0_i32_0 : i32, i32
  }
  func.func @transform_5(%arg0: i32) -> (i32, i32) {
    %c0_i32 = arith.constant 0 : i32
    %c0_i32_0 = arith.constant 0 : i32
    return %arg0, %c0_i32 : i32, i32
  }
}

</mosaic_0001>

<llo_original>
// kernel: _ffn_impl.1
$region0: #{_ffn_impl.1}
  #allocation0 [shape = 'u32[]', space=smem, size = 0x4, offset = 0x4, fixed_abs, tag = 'smem constant byte address 0x4 - core index']
  #allocation1 [shape = 'u32[144,128]{1,0:T(1,128)}', space=vmem, size = 0x12000, scoped, tag = 'internal scratch']
  %s0 = inlined_call_operand.vmem [shape: f32[16,128], index: 0, kind: input, shape index: {}]
  %s1 = inlined_call_operand.hbm [shape: f32[128,128], index: 1, kind: input, shape index: {}]
  %s2 = inlined_call_operand.vmem [shape: f32[1,128], index: 2, kind: input, shape index: {}]
  %s3 = inlined_call_operand.hbm [shape: f32[128,128], index: 3, kind: input, shape index: {}]
  %s4 = inlined_call_operand.vmem [shape: f32[1,128], index: 4, kind: input, shape index: {}]
  %s5 = inlined_call_operand.vmem [shape: f32[16,128], index: 5, kind: output, shape index: {}]
  %s6 = sld [smem:[#allocation0]]
  $region38: #{_ffn_impl.1} parent=0
    _
  %s8 = ssub.s32 1, %s6
  %s9 = scalar_select 0, %s8, %s6
  $region1: #{_ffn_impl.1} parent=0
    #allocation2 [shape = 'u8[65536]{0}', space=vmem, size = 0x10000, scoped, tag = 'input window, operand 1, single buffered']
    #allocation3 [shape = 's32[1]{0}', space=sflag, size = 0x4, scoped, tag = 'scoped memory for _ffn_impl.1']
    #allocation4 [shape = 'u8[65536]{0}', space=vmem, size = 0x10000, scoped, tag = 'input window, operand 3, single buffered']
    #allocation5 [shape = 's32[1]{0}', space=sflag, size = 0x4, scoped, tag = 'scoped memory for _ffn_impl.1']
    %10 = vsyncpa [#allocation3], 0
    %11 = vsyncpa [#allocation5], 0
    // Predicated region
    $region2: #{_ffn_impl.1} parent=1 // pred_check
      _
    $region3: #{_ffn_impl.1} parent=1 // pred_check_branch
      %13 = sbr.rel (0) target = $region5
    $region4: #{_ffn_impl.1} parent=1 // pred_region
      _
    $region5: #{_ffn_impl.1} parent=1 // pred_fallthru
      _
    // Predicated region
    $region6: #{_ffn_impl.1} parent=1 // pred_check
      _
    $region7: #{_ffn_impl.1} parent=1 // pred_check_branch
      %15 = sbr.rel (0) target = $region9
    $region8: #{_ffn_impl.1} parent=1 // pred_region
      %s17 = ssub.s32 2048, 2048
      %18 = vsyncadd [#allocation3], %s17
      %s19 = sshll.u32 [#allocation2], 4
      %s20 = int_to_ptr.vmem [resolvable:$true] %s19
      %25 = dma.hbm_to_vmem [thread:$0]  %s1, 2048, %s20, [#allocation3], 128, 128, 8
    $region9: #{_ffn_impl.1} parent=1 // pred_fallthru
      _
    // Predicated region
    $region10: #{_ffn_impl.1} parent=1 // pred_check
      _
    $region11: #{_ffn_impl.1} parent=1 // pred_check_branch
      %27 = sbr.rel (0) target = $region13
    $region12: #{_ffn_impl.1} parent=1 // pred_region
      _
    $region13: #{_ffn_impl.1} parent=1 // pred_fallthru
      _
    // Predicated region
    $region14: #{_ffn_impl.1} parent=1 // pred_check
      _
    $region15: #{_ffn_impl.1} parent=1 // pred_check_branch
      %29 = sbr.rel (0) target = $region17
    $region16: #{_ffn_impl.1} parent=1 // pred_region
      %s31 = ssub.s32 2048, 2048
      %32 = vsyncadd [#allocation5], %s31
      %s33 = sshll.u32 [#allocation4], 4
      %s34 = int_to_ptr.vmem [resolvable:$true] %s33
      %39 = dma.hbm_to_vmem [thread:$0]  %s3, 2048, %s34, [#allocation5], 128, 128, 8
    $region17: #{_ffn_impl.1} parent=1 // pred_fallthru
      _
    // Predicated region
    $region18: #{_ffn_impl.1} parent=1 // pred_check
      _
    $region19: #{_ffn_impl.1} parent=1 // pred_check_branch
      %41 = sbr.rel (0) target = $region21
    $region20: #{_ffn_impl.1} parent=1 // pred_region
      _
    $region21: #{_ffn_impl.1} parent=1 // pred_fallthru
      _
    // Predicated region
    $region22: #{_ffn_impl.1} parent=1 // pred_check
      _
    $region23: #{_ffn_impl.1} parent=1 // pred_check_branch
      %43 = sbr.rel (0) target = $region25
    $region24: #{_ffn_impl.1} parent=1 // pred_region
      %44 = dma.done [#allocation3], 2048
    $region25: #{_ffn_impl.1} parent=1 // pred_fallthru
      _
    // Predicated region
    $region26: #{_ffn_impl.1} parent=1 // pred_check
      _
    $region27: #{_ffn_impl.1} parent=1 // pred_check_branch
      %46 = sbr.rel (0) target = $region29
    $region28: #{_ffn_impl.1} parent=1 // pred_region
      %47 = dma.done [#allocation5], 2048
    $region29: #{_ffn_impl.1} parent=1 // pred_fallthru
      _
    %v48 = vld [vmem:[%s0] sm:$0xff]
    %v49 = vld [vmem:[%s0 + $0x8] sm:$0xff]
    %v50 = vld [vmem:[#allocation2] sm:$0xff]
    %v51 = vld [vmem:[#allocation2 + $0x8] sm:$0xff]
    %v52 = vld [vmem:[#allocation2 + $0x10] sm:$0xff]
    %v53 = vld [vmem:[#allocation2 + $0x18] sm:$0xff]
    %v54 = vld [vmem:[#allocation2 + $0x20] sm:$0xff]
    %v55 = vld [vmem:[#allocation2 + $0x28] sm:$0xff]
    %v56 = vld [vmem:[#allocation2 + $0x30] sm:$0xff]
    %v57 = vld [vmem:[#allocation2 + $0x38] sm:$0xff]
    %v58 = vld [vmem:[#allocation2 + $0x40] sm:$0xff]
    %v59 = vld [vmem:[#allocation2 + $0x48] sm:$0xff]
    %v60 = vld [vmem:[#allocation2 + $0x50] sm:$0xff]
    %v61 = vld [vmem:[#allocation2 + $0x58] sm:$0xff]
    %v62 = vld [vmem:[#allocation2 + $0x60] sm:$0xff]
    %v63 = vld [vmem:[#allocation2 + $0x68] sm:$0xff]
    %v64 = vld [vmem:[#allocation2 + $0x70] sm:$0xff]
    %v65 = vld [vmem:[#allocation2 + $0x78] sm:$0xff]
    %v66 = vld [vmem:[%s2] sm:$0x1]
    %v68 = vlaneseq
    %v69 = vshrl.u32 %v68, 7
    %v70 = vsub.s32 0, %v69
    %v71 = vrot.slane %v66, %v70
    %73 = vmatprep.subr.mxu0 0.0
    %74 = vmatpush1.msra.mxu0 %v65
    %75 = vmatprep.subr.mxu0 0.0
    %76 = vmatpush1.msra.mxu0 %v64
    %77 = vmatprep.subr.mxu0 0.0
    %78 = vmatpush1.msra.mxu0 %v63
    %79 = vmatprep.subr.mxu0 0.0
    %80 = vmatpush1.msra.mxu0 %v62
    %81 = vmatprep.subr.mxu0 0.0
    %82 = vmatpush1.msra.mxu0 %v61
    %83 = vmatprep.subr.mxu0 0.0
    %84 = vmatpush1.msra.mxu0 %v60
    %85 = vmatprep.subr.mxu0 0.0
    %86 = vmatpush1.msra.mxu0 %v59
    %87 = vmatprep.subr.mxu0 0.0
    %88 = vmatpush1.msra.mxu0 %v58
    %89 = vmatprep.subr.mxu0 0.0
    %90 = vmatpush1.msra.mxu0 %v57
    %91 = vmatprep.subr.mxu0 0.0
    %92 = vmatpush1.msra.mxu0 %v56
    %93 = vmatprep.subr.mxu0 0.0
    %94 = vmatpush1.msra.mxu0 %v55
    %95 = vmatprep.subr.mxu0 0.0
    %96 = vmatpush1.msra.mxu0 %v54
    %97 = vmatprep.subr.mxu0 0.0
    %98 = vmatpush1.msra.mxu0 %v53
    %99 = vmatprep.subr.mxu0 0.0
    %100 = vmatpush1.msra.mxu0 %v52
    %101 = vmatprep.subr.mxu0 0.0
    %102 = vmatpush1.msra.mxu0 %v51
    %103 = vmatprep.subr.mxu0 0.0
    %104 = vmatpush1.msra.mxu0 %v50
    %105 = vmatprep.subr.mxu0 0.0
    %106 = vmatpush2.msra.mxu0 0.0
    %107 = vmatprep.subr.mxu0 0.0
    %108 = vmatpush2.msra.mxu0 0.0
    %109 = vmatprep.subr.mxu0 0.0
    %110 = vmatpush2.msra.mxu0 0.0
    %111 = vmatprep.subr.mxu0 0.0
    %112 = vmatpush2.msra.mxu0 0.0
    %113 = vmatprep.subr.mxu0 0.0
    %114 = vmatpush2.msra.mxu0 0.0
    %115 = vmatprep.subr.mxu0 0.0
    %116 = vmatpush2.msra.mxu0 0.0
    %117 = vmatprep.subr.mxu0 0.0
    %118 = vmatpush2.msra.mxu0 0.0
    %119 = vmatprep.subr.mxu0 0.0
    %120 = vmatpush2.msra.mxu0 0.0
    %121 = vmatprep.subr.mxu0 0.0
    %122 = vmatpush2.msra.mxu0 0.0
    %123 = vmatprep.subr.mxu0 0.0
    %124 = vmatpush2.msra.mxu0 0.0
    %125 = vmatprep.subr.mxu0 0.0
    %126 = vmatpush2.msra.mxu0 0.0
    %127 = vmatprep.subr.mxu0 0.0
    %128 = vmatpush2.msra.mxu0 0.0
    %129 = vmatprep.subr.mxu0 0.0
    %130 = vmatpush2.msra.mxu0 0.0
    %131 = vmatprep.subr.mxu0 0.0
    %132 = vmatpush2.msra.mxu0 0.0
    %133 = vmatprep.subr.mxu0 0.0
    %134 = vmatpush2.msra.mxu0 0.0
    %135 = vmatprep.subr.mxu0 0.0
    %136 = vmatpush2.msra.mxu0 0.0
    %137 = vmatprep.mubr.f32.mxu0 0.0
    %138 = vmatmul.mubr.f32.gmra.mxu0 %v48
    %v139 = vpop.f32.mrf.mxu0
    %v140 = vadd.f32 %v71, %v139
    %v141 = vpop.f32.mrf.mxu0
    %142 = vmatprep.mubr.f32.mxu0 0.0
    %143 = vmatmul.mubr.f32.gmra.mxu0 %v49
    %v144 = vpop.f32.mrf.mxu0
    %v145 = vadd.f32 %v71, %v144
    %v146 = vpop.f32.mrf.mxu0
    %147 = vdwg.mxu0
    %v148 = vmax.f32 %v140, 0.0
    %v149 = vmax.f32 %v145, 0.0
    %v150 = vld [vmem:[#allocation4] sm:$0xff]
    %v151 = vld [vmem:[#allocation4 + $0x8] sm:$0xff]
    %v152 = vld [vmem:[#allocation4 + $0x10] sm:$0xff]
    %v153 = vld [vmem:[#allocation4 + $0x18] sm:$0xff]
    %v154 = vld [vmem:[#allocation4 + $0x20] sm:$0xff]
    %v155 = vld [vmem:[#allocation4 + $0x28] sm:$0xff]
    %v156 = vld [vmem:[#allocation4 + $0x30] sm:$0xff]
    %v157 = vld [vmem:[#allocation4 + $0x38] sm:$0xff]
    %v158 = vld [vmem:[#allocation4 + $0x40] sm:$0xff]
    %v159 = vld [vmem:[#allocation4 + $0x48] sm:$0xff]
    %v160 = vld [vmem:[#allocation4 + $0x50] sm:$0xff]
    %v161 = vld [vmem:[#allocation4 + $0x58] sm:$0xff]
    %v162 = vld [vmem:[#allocation4 + $0x60] sm:$0xff]
    %v163 = vld [vmem:[#allocation4 + $0x68] sm:$0xff]
    %v164 = vld [vmem:[#allocation4 + $0x70] sm:$0xff]
    %v165 = vld [vmem:[#allocation4 + $0x78] sm:$0xff]
    %v166 = vld [vmem:[%s4] sm:$0x1]
    %v168 = vlaneseq
    %v169 = vshrl.u32 %v168, 7
    %v170 = vsub.s32 0, %v169
    %v171 = vrot.slane %v166, %v170
    %173 = vmatprep.subr.mxu0 0.0
    %174 = vmatpush1.msra.mxu0 %v165
    %175 = vmatprep.subr.mxu0 0.0
    %176 = vmatpush1.msra.mxu0 %v164
    %177 = vmatprep.subr.mxu0 0.0
    %178 = vmatpush1.msra.mxu0 %v163
    %179 = vmatprep.subr.mxu0 0.0
    %180 = vmatpush1.msra.mxu0 %v162
    %181 = vmatprep.subr.mxu0 0.0
    %182 = vmatpush1.msra.mxu0 %v161
    %183 = vmatprep.subr.mxu0 0.0
    %184 = vmatpush1.msra.mxu0 %v160
    %185 = vmatprep.subr.mxu0 0.0
    %186 = vmatpush1.msra.mxu0 %v159
    %187 = vmatprep.subr.mxu0 0.0
    %188 = vmatpush1.msra.mxu0 %v158
    %189 = vmatprep.subr.mxu0 0.0
    %190 = vmatpush1.msra.mxu0 %v157
    %191 = vmatprep.subr.mxu0 0.0
    %192 = vmatpush1.msra.mxu0 %v156
    %193 = vmatprep.subr.mxu0 0.0
    %194 = vmatpush1.msra.mxu0 %v155
    %195 = vmatprep.subr.mxu0 0.0
    %196 = vmatpush1.msra.mxu0 %v154
    %197 = vmatprep.subr.mxu0 0.0
    %198 = vmatpush1.msra.mxu0 %v153
    %199 = vmatprep.subr.mxu0 0.0
    %200 = vmatpush1.msra.mxu0 %v152
    %201 = vmatprep.subr.mxu0 0.0
    %202 = vmatpush1.msra.mxu0 %v151
    %203 = vmatprep.subr.mxu0 0.0
    %204 = vmatpush1.msra.mxu0 %v150
    %205 = vmatprep.subr.mxu0 0.0
    %206 = vmatpush2.msra.mxu0 0.0
    %207 = vmatprep.subr.mxu0 0.0
    %208 = vmatpush2.msra.mxu0 0.0
    %209 = vmatprep.subr.mxu0 0.0
    %210 = vmatpush2.msra.mxu0 0.0
    %211 = vmatprep.subr.mxu0 0.0
    %212 = vmatpush2.msra.mxu0 0.0
    %213 = vmatprep.subr.mxu0 0.0
    %214 = vmatpush2.msra.mxu0 0.0
    %215 = vmatprep.subr.mxu0 0.0
    %216 = vmatpush2.msra.mxu0 0.0
    %217 = vmatprep.subr.mxu0 0.0
    %218 = vmatpush2.msra.mxu0 0.0
    %219 = vmatprep.subr.mxu0 0.0
    %220 = vmatpush2.msra.mxu0 0.0
    %221 = vmatprep.subr.mxu0 0.0
    %222 = vmatpush2.msra.mxu0 0.0
    %223 = vmatprep.subr.mxu0 0.0
    %224 = vmatpush2.msra.mxu0 0.0
    %225 = vmatprep.subr.mxu0 0.0
    %226 = vmatpush2.msra.mxu0 0.0
    %227 = vmatprep.subr.mxu0 0.0
    %228 = vmatpush2.msra.mxu0 0.0
    %229 = vmatprep.subr.mxu0 0.0
    %230 = vmatpush2.msra.mxu0 0.0
    %231 = vmatprep.subr.mxu0 0.0
    %232 = vmatpush2.msra.mxu0 0.0
    %233 = vmatprep.subr.mxu0 0.0
    %234 = vmatpush2.msra.mxu0 0.0
    %235 = vmatprep.subr.mxu0 0.0
    %236 = vmatpush2.msra.mxu0 0.0
    %237 = vmatprep.mubr.f32.mxu0 0.0
    %238 = vmatmul.mubr.f32.gmra.mxu0 %v148
    %v239 = vpop.f32.mrf.mxu0
    %v240 = vadd.f32 %v171, %v239
    %v241 = vpop.f32.mrf.mxu0
    %242 = vmatprep.mubr.f32.mxu0 0.0
    %243 = vmatmul.mubr.f32.gmra.mxu0 %v149
    %v244 = vpop.f32.mrf.mxu0
    %v245 = vadd.f32 %v171, %v244
    %v246 = vpop.f32.mrf.mxu0
    %247 = vdwg.mxu0
    %248 = vst [vmem:[%s5] sm:$0xff] %v240
    %249 = vst [vmem:[%s5 + $0x8] sm:$0xff] %v245
    // Predicated region
    $region30: #{_ffn_impl.1} parent=1 // pred_check
      _
    $region31: #{_ffn_impl.1} parent=1 // pred_check_branch
      %251 = sbr.rel (0) target = $region33
    $region32: #{_ffn_impl.1} parent=1 // pred_region
      _
    $region33: #{_ffn_impl.1} parent=1 // pred_fallthru
      _
    // Predicated region
    $region34: #{_ffn_impl.1} parent=1 // pred_check
      _
    $region35: #{_ffn_impl.1} parent=1 // pred_check_branch
      %253 = sbr.rel (0) target = $region37
    $region36: #{_ffn_impl.1} parent=1 // pred_region
      _
    $region37: #{_ffn_impl.1} parent=1 // pred_fallthru
      _
    %254 = vsyncpa [#allocation3], 1
    %255 = vsyncpa [#allocation5], 1

</llo_original>
